<compile_context>
chip_gen: v7x
topology: tpu7x:2x2x1
jax: 0.10.0
libtpu: 0.0.40
codegen_flags: <defaults>
</compile_context>

<pallas_src>
import functools

import jax
import jax.numpy as jnp
from jax.experimental import pallas as pl
from jax.experimental.pallas import tpu as pltpu

# --- quantizer constants (derived from the module's quant configs) ----------
SCALING_MIN_VAL = 2e-16
RELU4_HI = 10.0
RELU4_STEP = 10.0 / 127.0     # QuantHardTanh, 8-bit narrow range, max_val=10
RELU8_HI = 10.0
RELU8_STEP = 10.0 / 255.0     # QuantReLU, 8-bit, max_val=10
RELU2_HI = 1.5
RELU2_STEP = 1.5 / 3.0        # QuantReLU, 2-bit, max_val=1.5


def _fq(x, lo, hi, step):
    """Fake-quantize: clip then round to the nearest quant level (f32 math)."""
    return jnp.round(jnp.clip(x, lo, hi) / step) * step


def _relu4(x):   # QuantHardTanh(bit_width=8, narrow, [-10, 10])
    return _fq(x, -RELU4_HI, RELU4_HI, RELU4_STEP)


def _relu8(x):   # QuantReLU(bit_width=8, max_val=10)
    return _fq(x, 0.0, RELU8_HI, RELU8_STEP)


def _relu3(x):   # QuantReLU(bit_width=2, max_val=1.5)
    return _fq(x, 0.0, RELU2_HI, RELU2_STEP)


# --- tiny probe: determine pltpu.roll shift convention -----------------------
def _roll_probe_kernel(x_ref, o_ref):
    o_ref[...] = pltpu.roll(x_ref[...], shift=1, axis=1)


def _roll_sign():
    """Return -1 if pltpu.roll matches jnp.roll (out[i] = x[i - shift]), else +1."""
    x = jax.lax.broadcasted_iota(jnp.float32, (8, 128), 1)
    out = pl.pallas_call(
        _roll_probe_kernel,
        out_shape=jax.ShapeDtypeStruct((8, 128), jnp.float32))(x)
    return -1 if float(out[0, 0]) > 64.0 else 1


# --- fused Pallas kernel ------------------------------------------------------
def fused_group_kernel(x_ref, w0, b0, w1, b1, w2, b2, w3, b3, o_ref,
                       *, indices, H, W, bpb, roll_sign):
    """Whole forward pass for a block of `bpb` images; everything stays in vregs.

    x_ref : (bpb, C, H*W) f32   lane-dense activations (channels on sublanes)
    wN    : (C, 9*C)      bf16  2-bit fake-quant weights, BN scale folded in
    bN    : (C, 1)        f32   folded BatchNorm bias
    o_ref : (bpb, C, H*W) f32   output
    """
    C = x_ref.shape[1]
    P = H * W
    N = bpb * P

    # Fold the batch slice into the lane axis (lane-aligned: P is a multiple of 128).
    if bpb == 1:
        x = x_ref[0]
    else:
        x = jnp.concatenate([x_ref[b] for b in range(bpb)], axis=-1)   # (C, N)

    # Per-lane (h, w) coordinates, used to zero the out-of-image taps.
    lane = jax.lax.broadcasted_iota(jnp.int32, (1, N), 1)
    wi = lane % W
    hi = (lane // W) % H

    def conv_bn(act, w_ref, b_ref):
        # act: (C, N) f32.  Build the (9C, N) im2col patch with lane rolls (XLU)
        # + border masks (VPU select); the patch never touches VMEM.
        taps = []
        for t in range(9):
            dy, dx = t // 3 - 1, t % 3 - 1
            s = dy * W + dx                      # tap[p] = act[p + s] when in-image
            if s == 0:
                tap = act
            else:
                tap = pltpu.roll(act, shift=(roll_sign * s) % N, axis=1)
            valid = None
            if dy == -1:
                valid = hi >= 1
            elif dy == 1:
                valid = hi <= H - 2
            if dx == -1:
                vw = wi >= 1
                valid = vw if valid is None else jnp.logical_and(valid, vw)
            elif dx == 1:
                vw = wi <= W - 2
                valid = vw if valid is None else jnp.logical_and(valid, vw)
            if valid is not None:
                tap = jnp.where(valid, tap, 0.0)
            taps.append(tap)
        # Sublane-aligned concat (each tap is exactly C=8 rows), single bf16 cast.
        patch = jnp.concatenate(taps, axis=0).astype(jnp.bfloat16)     # (9C, N)
        # Transposed matmul: (C, 9C) x (9C, N) -> (C, N); bf16 MXU, f32 acc.
        y = jnp.dot(w_ref[...], patch, preferred_element_type=jnp.float32)
        return y + b_ref[...]                                          # folded BN bias

    states = [x]
    identity_b0 = x

    # block 0, layer 0
    out_b0l0 = conv_bn(x, w0, b0)                                   # conv0 + bn0
    x_b0l1 = _relu4(states[indices[0]]) + _relu4(out_b0l0)          # op0: skip_connect
    states.append(_relu8(x_b0l1))
    x_b0l1 = _relu3(x_b0l1)

    # block 0, layer 1
    out_b0l1 = conv_bn(x_b0l1, w1, b1)                              # conv1 + bn1
    out_b0l1 = _relu4(out_b0l1) + _relu4(identity_b0)               # downsample=Identity
    x_b1l0 = _relu4(states[indices[1]]) + _relu4(out_b0l1)          # op1: skip_connect
    states.append(_relu8(x_b1l0))
    x_b1l0 = _relu3(x_b1l0)
    identity_b1 = x_b1l0

    # block 1, layer 0
    out_b1l0 = conv_bn(x_b1l0, w2, b2)                              # conv2 + bn2
    x_b1l1 = _relu4(out_b1l0) + _relu4(states[indices[2]])          # op2: skip_connect
    states.append(_relu8(x_b1l1))
    x_b1l1 = _relu3(x_b1l1)

    # block 1, layer 1
    out_b1l1 = conv_bn(x_b1l1, w3, b3)                              # conv3 + bn3
    out_b1l1 = _relu4(out_b1l1) + _relu4(identity_b1)
    group_out = _relu4(states[indices[3]]) + _relu4(out_b1l1)       # op3: skip_connect
    group_out = _relu3(group_out)

    # Un-fold the batch (lane-aligned slices; full-width unmasked stores).
    if bpb == 1:
        o_ref[0] = group_out
    else:
        for b in range(bpb):
            o_ref[b] = group_out[:, b * P:(b + 1) * P]


def group_explore1_forward(x_nchw, params, indices=(0, 1, 2, 3),
                           roll_sign=-1, batch_per_block=None):
    B, C, H, W = x_nchw.shape
    P = H * W
    # NCHW with (H, W) flattened is already lane-dense (channels on sublanes,
    # pixels on lanes) -> no transposes, the reshape is free.
    x = x_nchw.reshape(B, C, P).astype(jnp.float32)

    # Default: one grid step with the whole batch folded into the matmul lane
    # dim (best on v5e/v6e).  On v7x with B>=2, pass batch_per_block=B//2 so the
    # two TensorCores each take half the batch via the "parallel" grid axis.
    bpb = B if batch_per_block is None else batch_per_block
    assert B % bpb == 0
    steps = B // bpb

    kernel = functools.partial(fused_group_kernel, indices=tuple(indices),
                               H=H, W=W, bpb=bpb, roll_sign=roll_sign)

    xspec_in = pl.BlockSpec((bpb, C, P), lambda i: (i, 0, 0))
    xspec_out = pl.BlockSpec((bpb, C, P), lambda i: (i, 0, 0))
    wspec = pl.BlockSpec((C, 9 * C), lambda i: (0, 0))
    bspec = pl.BlockSpec((C, 1), lambda i: (0, 0))

    flops = 2 * 4 * B * P * C * (9 * C)                      # 4 convs
    bytes_accessed = 2 * B * C * P * 4 + 4 * (C * 9 * C * 2 + C * 4)

    out = pl.pallas_call(
        kernel,
        out_shape=jax.ShapeDtypeStruct((B, C, P), jnp.float32),
        grid=(steps,),
        in_specs=[xspec_in, wspec, bspec, wspec, bspec, wspec, bspec, wspec, bspec],
        out_specs=xspec_out,
        compiler_params=pltpu.CompilerParams(
            dimension_semantics=("parallel",)),
        cost_estimate=pl.CostEstimate(flops=flops, transcendentals=0,
                                      bytes_accessed=bytes_accessed),
    )(x, params["w0"], params["b0"], params["w1"], params["b1"],
      params["w2"], params["b2"], params["w3"], params["b3"])

    return out.reshape(B, C, H, W)


# --- parameter construction (deterministic, synthetic) -----------------------
def fake_quant_weight_2bit(w):
    # w: (Cout, Cin, 3, 3); per-output-channel MAX stats, narrow range -> {-1,0,1}*scale
    scale = jnp.max(jnp.abs(w), axis=(1, 2, 3), keepdims=True)
    scale = jnp.maximum(scale, SCALING_MIN_VAL)
    return jnp.clip(jnp.round(w / scale), -1.0, 1.0) * scale


def prep_conv_bn(kw, kb, cin, cout, eps=1e-5):
    w = 0.1 * jax.random.normal(kw, (cout, cin, 3, 3), jnp.float32)
    wq = fake_quant_weight_2bit(w)
    # (Cout,Cin,ky,kx) -> (Cout,ky,kx,Cin) -> (Cout, 9*Cin):
    # column r = (3*ky + kx)*Cin + cin  (matches the tap order inside the kernel)
    wmat = jnp.transpose(wq, (0, 2, 3, 1)).reshape(cout, 9 * cin)
    # synthetic BatchNorm statistics, folded to an affine (inference form)
    k1, k2, k3, k4 = jax.random.split(kb, 4)
    gamma = 1.0 + 0.1 * jax.random.normal(k1, (cout,), jnp.float32)
    beta = 0.1 * jax.random.normal(k2, (cout,), jnp.float32)
    mean = 0.1 * jax.random.normal(k3, (cout,), jnp.float32)
    var = jnp.abs(1.0 + 0.1 * jax.random.normal(k4, (cout,), jnp.float32))
    scale = gamma / jnp.sqrt(var + eps)
    bias = beta - mean * scale
    w_folded = (wmat * scale[:, None]).astype(jnp.bfloat16)   # BN scale folded per row
    return w_folded, bias.reshape(cout, 1).astype(jnp.float32)


def make_params(key, c):
    ks = jax.random.split(key, 8)
    params = {}
    for i in range(4):
        w, b = prep_conv_bn(ks[i], ks[4 + i], c, c)
        params[f"w{i}"] = w
        params[f"b{i}"] = b
    return params


# --- pure-JAX reference (same bf16 MXU path), used as a soft sanity check ----
def reference_forward(x_nchw, params, indices=(0, 1, 2, 3)):
    B, C, H, W = x_nchw.shape
    x = x_nchw.astype(jnp.float32)

    def conv_bn(act, wmat, bias):
        w = wmat.reshape(C, 3, 3, C).transpose(0, 3, 1, 2)         # OIHW, bf16
        y = jax.lax.conv_general_dilated(
            act.astype(jnp.bfloat16), w, window_strides=(1, 1),
            padding=((1, 1), (1, 1)),
            dimension_numbers=("NCHW", "OIHW", "NCHW"),
            preferred_element_type=jnp.float32)
        return y + bias.reshape(1, C, 1, 1)

    states = [x]
    identity_b0 = x
    out = conv_bn(x, params["w0"], params["b0"])
    x1 = _relu4(states[indices[0]]) + _relu4(out)
    states.append(_relu8(x1)); x1 = _relu3(x1)
    out = conv_bn(x1, params["w1"], params["b1"])
    out = _relu4(out) + _relu4(identity_b0)
    x2 = _relu4(states[indices[1]]) + _relu4(out)
    states.append(_relu8(x2)); x2 = _relu3(x2)
    identity_b1 = x2
    out = conv_bn(x2, params["w2"], params["b2"])
    x3 = _relu4(out) + _relu4(states[indices[2]])
    states.append(_relu8(x3)); x3 = _relu3(x3)
    out = conv_bn(x3, params["w3"], params["b3"])
    out = _relu4(out) + _relu4(identity_b1)
    g = _relu4(states[indices[3]]) + _relu4(out)
    return _relu3(g)


if __name__ == "__main__":
    B, C, H, W = 2, 8, 16, 16          # in_planes == out_planes == 8, stride_first=1
    key = jax.random.PRNGKey(0)
    kx, kp = jax.random.split(key)
    x = jax.random.normal(kx, (B, C, H, W), jnp.float32)
    params = make_params(kp, C)

    sign = _roll_sign()                # resolve pltpu.roll shift convention once
    fwd = jax.jit(functools.partial(group_explore1_forward,
                                    indices=(0, 1, 2, 3), roll_sign=sign))
    out = jax.block_until_ready(fwd(x, params))
    assert out.shape == (B, C, H, W), out.shape

    # Soft numerical sanity check against the pure-JAX reference (identical bf16
    # compute path); loose threshold absorbs rare fake-quant boundary flips while
    # still catching systematic layout / roll / mask errors.
    ref = jax.block_until_ready(reference_forward(x, params, (0, 1, 2, 3)))
    bad = int(jnp.sum(jnp.abs(out - ref) > 0.26))
    assert bad <= 0.02 * out.size, f"kernel/reference mismatch: {bad}/{out.size}"

    print("KERNEL_OK")
</pallas_src>

<mosaic_0001>
module attributes {stable_mosaic.version = 11 : i64} {
  func.func @_roll_probe_kernel(%arg0: memref<8x128xf32, #tpu.memory_space<vmem>>, %arg1: memref<8x128xf32, #tpu.memory_space<vmem>>) attributes {dimension_semantics = [], scalar_prefetch = 0 : i64, scratch_operands = 0 : i64, tpu.core_type = #tpu.core_type<tc>} {
    %c0 = arith.constant 0 : index
    %c0_0 = arith.constant 0 : index
    %0 = vector.load %arg0[%c0, %c0_0] : memref<8x128xf32, #tpu.memory_space<vmem>>, vector<8x128xf32>
    %c1_i32 = arith.constant 1 : i32
    %1 = tpu.dynamic_rotate %0 by %c1_i32 dim 1 : vector<8x128xf32>, i32 -> vector<8x128xf32>
    %c0_1 = arith.constant 0 : index
    %c0_2 = arith.constant 0 : index
    %2 = vector.load %arg1[%c0_1, %c0_2] : memref<8x128xf32, #tpu.memory_space<vmem>>, vector<8x128xf32>
    tpu.vector_store %arg1[%c0_1, %c0_2], %1 {strides = array<i32>} : memref<8x128xf32, #tpu.memory_space<vmem>>, vector<8x128xf32>,
    return
  }
}

</mosaic_0001>

<llo_original>
// kernel: tpu_custom_call.1
$region0: #{tpu_custom_call.1}
  #allocation0 [shape = 'u32[]', space=smem, size = 0x4, offset = 0x4, fixed_abs, tag = 'smem constant byte address 0x4 - core index']
  #allocation1 [shape = 'u32[144,128]{1,0:T(1,128)}', space=vmem, size = 0x12000, scoped, tag = 'internal scratch']
  %s0 = inlined_call_operand.hbm [shape: f32[8,128], index: 0, kind: input, shape index: {}]
  %s1 = inlined_call_operand.hbm [shape: f32[8,128], index: 1, kind: output, shape index: {}]
  %s2 = sld [smem:[#allocation0]]
  $region18: #{tpu_custom_call.1} parent=0
    _
  %s4 = ssub.s32 1, %s2
  %s5 = scalar_select 0, %s4, %s2
  $region1: #{tpu_custom_call.1} parent=0
    #allocation2 [shape = 'u8[4096]{0}', space=vmem, size = 0x1000, scoped, tag = 'input window, operand 0, single buffered']
    #allocation3 [shape = 's32[1]{0}', space=sflag, size = 0x4, scoped, tag = 'scoped memory for tpu_custom_call.1']
    #allocation4 [shape = 's32[1]{0}', space=sflag, size = 0x4, scoped, tag = 'scoped memory for tpu_custom_call.1']
    #allocation5 [shape = 'u8[4096]{0}', space=vmem, size = 0x1000, scoped, tag = 'output window, operand 0, single buffered']
    %6 = vsyncpa [#allocation3], 0
    %7 = vsyncpa [#allocation4], 0
    // Predicated region
    $region2: #{tpu_custom_call.1} parent=1 // pred_check
      _
    $region3: #{tpu_custom_call.1} parent=1 // pred_check_branch
      %9 = sbr.rel (0) target = $region5
    $region4: #{tpu_custom_call.1} parent=1 // pred_region
      %s11 = ssub.s32 128, 128
      %12 = vsyncadd [#allocation3], %s11
      %s14 = sshll.u32 [#allocation2], 4
      %s15 = int_to_ptr.vmem [resolvable:$true] %s14
      %17 = dma.hbm_to_vmem [thread:$0]  %s0, 128, %s15, [#allocation3]
    $region5: #{tpu_custom_call.1} parent=1 // pred_fallthru
      _
    // Predicated region
    $region6: #{tpu_custom_call.1} parent=1 // pred_check
      _
    $region7: #{tpu_custom_call.1} parent=1 // pred_check_branch
      %19 = sbr.rel (0) target = $region9
    $region8: #{tpu_custom_call.1} parent=1 // pred_region
      %20 = dma.done [#allocation3], 128
    $region9: #{tpu_custom_call.1} parent=1 // pred_fallthru
      _
    %v21 = vld [vmem:[#allocation2] sm:$0xff]
    %22 = vrot.lane.b32.xlu0 %v21, 1
    %v23 = vpop.permute.xlu0 %22
    %24 = vst [vmem:[#allocation5] sm:$0xff] %v23
    // Predicated region
    $region10: #{tpu_custom_call.1} parent=1 // pred_check
      _
    $region11: #{tpu_custom_call.1} parent=1 // pred_check_branch
      %26 = sbr.rel (0) target = $region13
    $region12: #{tpu_custom_call.1} parent=1 // pred_region
      %s28 = ssub.s32 128, 128
      %29 = vsyncadd [#allocation4], %s28
      %s31 = sshll.u32 [#allocation5], 4
      %s32 = int_to_ptr.vmem [resolvable:$true] %s31
      %34 = dma.vmem_to_hbm [thread:$0]  %s32, 128, %s1, [#allocation4]
    $region13: #{tpu_custom_call.1} parent=1 // pred_fallthru
      _
    // Predicated region
    $region14: #{tpu_custom_call.1} parent=1 // pred_check
      _
    $region15: #{tpu_custom_call.1} parent=1 // pred_check_branch
      %36 = sbr.rel (0) target = $region17
    $region16: #{tpu_custom_call.1} parent=1 // pred_region
      %37 = dma.done [#allocation4], 128
    $region17: #{tpu_custom_call.1} parent=1 // pred_fallthru
      _
    %38 = vsyncpa [#allocation3], 1
    %39 = vsyncpa [#allocation4], 1

</llo_original>
